<compile_context>
chip_gen: v7x
topology: tpu7x:2x2x1
jax: 0.10.0
libtpu: 0.0.40
codegen_flags: <defaults>
</compile_context>

<pallas_src>
import math

import jax
import jax.numpy as jnp
from jax import lax
from jax.experimental import pallas as pl
from jax.experimental.pallas import tpu as pltpu

HIDDEN = 64            # transformer.hidden_dim
NUM_GROUPS = 32        # GroupNorm(32, hidden_dim)
NUM_CLASSES = 9
NUM_QUERIES = 300
NUM_FEATURE_LEVELS = 4
NUM_DEC_LAYERS = 3     # transformer.decoder.num_layers (stub)
GN_EPS = 1e-5
INV_SIG_EPS = 1e-5
CLS_PAD = 16           # logits padded to 16 lanes inside the fused head output slab
BOX_PAD = 16           # box coords padded to 16 lanes


def _tensorcores_per_chip():
    """Macro-block count for the head kernel: 2 only where there are 2 TensorCores (v7x).

    On v5e/v6e a grid=(2,) 'parallel' split is just a serial loop that halves matmul M
    and adds per-step overhead, so default to 1 there (and on any unknown backend)."""
    try:
        kind = (jax.devices()[0].device_kind or "").lower()
    except Exception:
        return 1
    return 2 if ("v7" in kind or "7x" in kind) else 1


# --------------------------------------------------------------------------
# Pallas kernel 1: fused pointwise/im2col conv + GroupNorm (batch folded, masked levels)
# --------------------------------------------------------------------------
def _conv_gn_kernel(x_ref, w_ref, b_ref, gamma_ref, beta_ref, p_ref, mask_ref, o_ref):
    """One feature level per grid step; batch is folded into the matmul M dimension."""
    _, B, HW, CK = x_ref.shape
    C = w_ref.shape[2]
    x = x_ref[0].reshape(B * HW, CK)                         # [B*HW, CK]
    y = jnp.dot(x, w_ref[0], preferred_element_type=jnp.float32) + b_ref[0]
    y = y.reshape(B, HW, C)
    # single-pass GroupNorm stats in f32 (E[y^2]-E[y]^2; fine for f32 + centered
    # activations — do NOT move these reductions to bf16). mask_ref holds
    # (row_is_valid / n_per_group) so masked sums directly give E[y], E[y^2] over the
    # valid spatial positions and padded rows never feed the reduction.
    m = mask_ref[0]                                          # [HW, 1]
    ym = y * m[None, :, :]
    s1 = jnp.sum(ym, axis=1)                                 # [B, C]  E[y]  (per channel)
    s2 = jnp.sum(ym * y, axis=1)                             # [B, C]  E[y^2]
    # tiny [C,C] group-membership projector keeps the per-group reduction robust for any
    # channels-per-group; cost is two small MXU ops per level (review: minor).
    p = p_ref[...]                                           # [C, C]
    mean_c = jnp.dot(s1, p, preferred_element_type=jnp.float32)   # per-group mean -> channels
    e2_c = jnp.dot(s2, p, preferred_element_type=jnp.float32)
    var_c = e2_c - mean_c * mean_c
    scale = lax.rsqrt(var_c + GN_EPS) * gamma_ref[0]         # [B, C]
    shift = beta_ref[0] - mean_c * scale                     # [B, C]  (mean/affine folded once)
    # TODO(synk): lane-dense [HW, B*C] output layout (unmasked 128-lane stores) is a known
    # follow-up; at stub sizes the 64-lane store is noise.
    o_ref[0] = y * scale[:, None, :] + shift[:, None, :]


def conv_gn_multi(x_pad, w, b, gamma, beta, mask_over_n):
    """x_pad: [L, B, HWmax, CK] f32;  w: [L, CK, C];  b/gamma/beta: [L, 1, C];
    mask_over_n: [L, HWmax, 1] = (row valid) / (valid_rows * channels_per_group).
    Returns [L, B, HWmax, C]; rows >= the per-level valid count are junk (caller slices)."""
    L, B, HWmax, CK = x_pad.shape
    C = w.shape[-1]
    cpg = C // NUM_GROUPS
    gidx = jnp.arange(C) // cpg
    proj = (gidx[:, None] == gidx[None, :]).astype(jnp.float32)      # [C, C]
    return pl.pallas_call(
        _conv_gn_kernel,
        out_shape=jax.ShapeDtypeStruct((L, B, HWmax, C), jnp.float32),
        grid=(L,),
        in_specs=[
            pl.BlockSpec((1, B, HWmax, CK), lambda l: (l, 0, 0, 0)),
            pl.BlockSpec((1, CK, C), lambda l: (l, 0, 0)),
            pl.BlockSpec((1, 1, C), lambda l: (l, 0, 0)),
            pl.BlockSpec((1, 1, C), lambda l: (l, 0, 0)),
            pl.BlockSpec((1, 1, C), lambda l: (l, 0, 0)),
            pl.BlockSpec((C, C), lambda l: (0, 0)),
            pl.BlockSpec((1, HWmax, 1), lambda l: (l, 0, 0)),
        ],
        out_specs=pl.BlockSpec((1, B, HWmax, C), lambda l: (l, 0, 0, 0)),
        compiler_params=pltpu.CompilerParams(dimension_semantics=("parallel",)),
    )(x_pad, w, b, gamma, beta, proj, mask_over_n)


# --------------------------------------------------------------------------
# Pallas kernel 2: fused detection heads (class Linear + bbox MLP + refs), big-M, bf16 MXU
# --------------------------------------------------------------------------
def _head_kernel(hs_ref, ref_ref, wp_ref, bp_ref, w2_ref, b2_ref, w3_ref, b3_ref, o_ref):
    """(layer, batch, query) rows flattened into one MXU M dimension per grid block.

    Matmul operands are bf16 (MXU-native), accumulation and all elementwise math f32."""
    H = hs_ref.shape[1]
    h = hs_ref[...]                                                        # [M, H] bf16
    # class head fused into bbox layer-1: wp = [w1 | class_w | 0], 128 lanes wide
    y = jnp.dot(h, wp_ref[...], preferred_element_type=jnp.float32) + bp_ref[...]
    x = jax.nn.relu(y[:, :H]).astype(jnp.bfloat16)                         # bbox layer 1
    x = jax.nn.relu(jnp.dot(x, w2_ref[...], preferred_element_type=jnp.float32)
                    + b2_ref[...]).astype(jnp.bfloat16)                    # bbox layer 2
    tmp = jnp.dot(x, w3_ref[...], preferred_element_type=jnp.float32) + b3_ref[...]   # [M, 16]
    # refs are pre-padded with 0.5 beyond the first two lanes, so inverse_sigmoid of the
    # pad lanes is exactly 0 -> plain elementwise add (no iota / MXU scatter needed).
    r = jnp.clip(ref_ref[...], 0.0, 1.0)
    inv = jnp.log(jnp.maximum(r, INV_SIG_EPS) / jnp.maximum(1.0 - r, INV_SIG_EPS))
    box = jax.nn.sigmoid(tmp + inv)                                        # cols 0:4 boxes
    # direct sub-slice stores (no jnp.concatenate -> no extra [M,32] VMEM copy)
    o_ref[:, :CLS_PAD] = y[:, H:H + CLS_PAD]                               # cols 0:9 logits
    o_ref[:, CLS_PAD:] = box


def detection_heads(hs, refs, head_params, num_macro_blocks=None):
    """hs: [L, B, Q, H], refs: [L, B, Q, 2] -> (logits [L,B,Q,9], boxes [L,B,Q,4])."""
    L, B, Q, H = hs.shape
    cw, cb, w1, b1, w2, b2, w3, b3 = head_params
    M = L * B * Q
    MB = num_macro_blocks if num_macro_blocks is not None else _tensorcores_per_chip()
    # single TC (v5e/v6e): one block, sublane-aligned; dual TC (v7x): per-block M padded
    # to a multiple of 256 for full-width MXU cadence.
    align = 256 if MB > 1 else 8
    MBLK = ((-(-M // MB)) + align - 1) // align * align
    MP = MBLK * MB

    hs_flat = jnp.pad(hs.reshape(M, H), ((0, MP - M), (0, 0))).astype(jnp.bfloat16)
    refs16 = jnp.full((MP, BOX_PAD), 0.5, jnp.float32)
    refs16 = refs16.at[:M, :2].set(refs.reshape(M, 2))

    # fused weights: one H x 128 RHS = [bbox layer-1 | class head | zero pad]  (bf16)
    wp = jnp.zeros((H, 128), jnp.float32)
    wp = wp.at[:, :H].set(w1).at[:, H:H + NUM_CLASSES].set(cw).astype(jnp.bfloat16)
    bp = jnp.zeros((1, 128), jnp.float32)
    bp = bp.at[0, :H].set(b1).at[0, H:H + NUM_CLASSES].set(cb)
    w3p = jnp.zeros((H, BOX_PAD), jnp.float32).at[:, :4].set(w3).astype(jnp.bfloat16)
    b3p = jnp.zeros((1, BOX_PAD), jnp.float32).at[0, :4].set(b3)

    out = pl.pallas_call(
        _head_kernel,
        out_shape=jax.ShapeDtypeStruct((MP, CLS_PAD + BOX_PAD), jnp.float32),
        grid=(MB,),
        in_specs=[
            pl.BlockSpec((MBLK, H), lambda i: (i, 0)),
            pl.BlockSpec((MBLK, BOX_PAD), lambda i: (i, 0)),
            pl.BlockSpec((H, 128), lambda i: (0, 0)),
            pl.BlockSpec((1, 128), lambda i: (0, 0)),
            pl.BlockSpec((H, H), lambda i: (0, 0)),
            pl.BlockSpec((1, H), lambda i: (0, 0)),
            pl.BlockSpec((H, BOX_PAD), lambda i: (0, 0)),
            pl.BlockSpec((1, BOX_PAD), lambda i: (0, 0)),
        ],
        out_specs=pl.BlockSpec((MBLK, CLS_PAD + BOX_PAD), lambda i: (i, 0)),
        compiler_params=pltpu.CompilerParams(dimension_semantics=("parallel",)),
    )(hs_flat, refs16, wp, bp, w2.astype(jnp.bfloat16), b2.reshape(1, -1), w3p, b3p)

    logits = out[:M, :NUM_CLASSES].reshape(L, B, Q, NUM_CLASSES)
    boxes = out[:M, CLS_PAD:CLS_PAD + 4].reshape(L, B, Q, 4)
    return logits, boxes


# --------------------------------------------------------------------------
# Plain-JAX glue
# --------------------------------------------------------------------------
def _pad_to(a, shape):
    return jnp.pad(a, [(0, s - d) for s, d in zip(shape, a.shape)])


def _row_mask_over_n(hw_max, hw_valid, cpg):
    m = (jnp.arange(hw_max) < hw_valid).astype(jnp.float32) / float(hw_valid * cpg)
    return m.reshape(hw_max, 1)


def im2col_s2(x, k=3, stride=2, pad=1):
    """NHWC -> patch rows [B, Ho*Wo, k*k*C] matching a (kh, kw, Cin)-flattened weight."""
    B, H, W, C = x.shape
    xp = jnp.pad(x, ((0, 0), (pad, pad), (pad, pad), (0, 0)))
    Ho = (H + 2 * pad - k) // stride + 1
    Wo = (W + 2 * pad - k) // stride + 1
    cols = []
    for dh in range(k):
        for dw in range(k):
            cols.append(xp[:, dh:dh + stride * Ho:stride, dw:dw + stride * Wo:stride, :])
    patches = jnp.stack(cols, axis=3).reshape(B, Ho * Wo, k * k * C)
    return patches, Ho, Wo


def resize_mask(masks, size):
    # F.interpolate(masks[None].float(), size=...).to(bool)[0]  (nearest, integer factors)
    m = jax.image.resize(masks.astype(jnp.float32), (masks.shape[0],) + size, method="nearest")
    return m.astype(bool)


def sine_pos(mask):
    # TODO(synk): position_encoding is an external module; simple sine stand-in here.
    B, Hh, Wh = mask.shape
    yy = jnp.linspace(0.0, 1.0, Hh)[None, :, None, None]
    xx = jnp.linspace(0.0, 1.0, Wh)[None, None, :, None]
    freqs = jnp.arange(HIDDEN // 4, dtype=jnp.float32) + 1.0
    py = jnp.concatenate([jnp.sin(yy * freqs), jnp.cos(yy * freqs)], -1)
    px = jnp.concatenate([jnp.sin(xx * freqs), jnp.cos(xx * freqs)], -1)
    return jnp.concatenate([jnp.broadcast_to(py, (B, Hh, Wh, HIDDEN // 2)),
                            jnp.broadcast_to(px, (B, Hh, Wh, HIDDEN // 2))], -1)


def backbone_stub(images, key):
    # TODO(synk): backbone is an external module; deterministic random pyramid stand-in.
    B = images.shape[0]
    k1, k2 = jax.random.split(key)
    return [jax.random.normal(k1, (B, 8, 8, 8), jnp.float32),     # NHWC, C=8
            jax.random.normal(k2, (B, 4, 4, 16), jnp.float32)]    # NHWC, C=16


def transformer_stub(src_list, mask_list, pos_list, query_embeds, key):
    # TODO(synk): deformable transformer is an external module; deterministic stand-in
    # producing (hs, init_reference, inter_references) with the shapes the head expects.
    B = src_list[0].shape[0]
    k1, k2, k3 = jax.random.split(key, 3)
    hs = 0.5 * jax.random.normal(k1, (NUM_DEC_LAYERS, B, NUM_QUERIES, HIDDEN), jnp.float32)
    init_ref = jax.nn.sigmoid(jax.random.normal(k2, (B, NUM_QUERIES, 2), jnp.float32))
    inter_refs = jax.nn.sigmoid(jax.random.normal(k3, (NUM_DEC_LAYERS, B, NUM_QUERIES, 2),
                                                  jnp.float32))
    return hs, init_ref, inter_refs


def init_params(key):
    keys = jax.random.split(key, 8)
    params = {}
    # input projections: 2 levels of 1x1, then 2 extra 3x3-stride2 levels (GN affine = 1/0).
    proj = []
    conv_cfg = [(8, 1), (16, 1), (16, 3), (HIDDEN, 3)]  # (Cin, kernel)
    for idx, (cin, k) in enumerate(conv_cfg):
        fan_in, fan_out = cin * k * k, HIDDEN * k * k
        bound = math.sqrt(6.0 / (fan_in + fan_out))      # xavier_uniform, gain=1
        w = jax.random.uniform(keys[idx], (k * k * cin, HIDDEN), jnp.float32, -bound, bound)
        proj.append((w, jnp.zeros((HIDDEN,), jnp.float32),
                     jnp.ones((HIDDEN,), jnp.float32), jnp.zeros((HIDDEN,), jnp.float32)))
    params["input_proj"] = proj
    # query embedding (nn.Embedding default ~ N(0,1)); consumed only by the transformer stub.
    params["query_embed"] = jax.random.normal(keys[4], (NUM_QUERIES, 2 * HIDDEN), jnp.float32)
    # class head: default Linear weight, bias = -log((1-p)/p), p=0.01
    bias_value = -math.log((1 - 0.01) / 0.01)
    bnd = 1.0 / math.sqrt(HIDDEN)
    cw = jax.random.uniform(keys[5], (HIDDEN, NUM_CLASSES), jnp.float32, -bnd, bnd)
    cb = jnp.full((NUM_CLASSES,), bias_value, jnp.float32)
    # bbox MLP: layers 0/1 default init, last layer weight/bias zero, bias[2:] = -2
    def lin(k_, i_, o_):
        b_ = 1.0 / math.sqrt(i_)
        kw_, kb_ = jax.random.split(k_)
        return (jax.random.uniform(kw_, (i_, o_), jnp.float32, -b_, b_),
                jax.random.uniform(kb_, (o_,), jnp.float32, -b_, b_))
    w1, b1 = lin(keys[6], HIDDEN, HIDDEN)
    w2, b2 = lin(keys[7], HIDDEN, HIDDEN)
    w3 = jnp.zeros((HIDDEN, 4), jnp.float32)
    b3 = jnp.array([0.0, 0.0, -2.0, -2.0], jnp.float32)
    params["heads"] = (cw, cb, w1, b1, w2, b2, w3, b3)
    return params


def conv_gn_ref(x_flat, w, b, gamma, beta):
    """Pure-JAX conv(1x1/im2col)+GroupNorm; also used for the tiny level-3 projection."""
    y = x_flat @ w + b
    B, HW, Cout = y.shape
    yg = y.reshape(B, HW, NUM_GROUPS, Cout // NUM_GROUPS)
    mean = yg.mean(axis=(1, 3), keepdims=True)
    var = ((yg - mean) ** 2).mean(axis=(1, 3), keepdims=True)
    yn = ((yg - mean) / jnp.sqrt(var + GN_EPS)).reshape(B, HW, Cout)
    return yn * gamma + beta


def deformable_detr_forward(images, masks, params, key):
    kb, kt = jax.random.split(key)
    features = backbone_stub(images, kb)
    B = images.shape[0]
    C = HIDDEN
    cpg = C // NUM_GROUPS

    # --- levels 0..1 (1x1 convs, CK 8/16): ONE fused conv+GN pallas_call padded to CK=16
    rows01, spatial01 = [], []
    for f in features:
        b_, h_, w_, c_ = f.shape
        rows01.append(f.reshape(b_, h_ * w_, c_))
        spatial01.append((h_, w_))
    hw_max = ((max(r.shape[1] for r in rows01) + 7) // 8) * 8
    ck_max = max(r.shape[2] for r in rows01)
    L01 = len(rows01)                                    # 2
    x_pad = jnp.stack([_pad_to(r, (B, hw_max, ck_max)) for r in rows01])
    w_pad = jnp.stack([_pad_to(params["input_proj"][l][0], (ck_max, C)) for l in range(L01)])
    b_st = jnp.stack([params["input_proj"][l][1].reshape(1, C) for l in range(L01)])
    g_st = jnp.stack([params["input_proj"][l][2].reshape(1, C) for l in range(L01)])
    be_st = jnp.stack([params["input_proj"][l][3].reshape(1, C) for l in range(L01)])
    mk_st = jnp.stack([_row_mask_over_n(hw_max, r.shape[1], cpg) for r in rows01])
    out01 = conv_gn_multi(x_pad, w_pad, b_st, g_st, be_st, mk_st)    # [2, B, hw_max, C]

    src_list, mask_list = [], []
    for l in range(L01):
        h_, w_ = spatial01[l]
        src_list.append(out01[l, :, :h_ * w_, :].reshape(B, h_, w_, C))
        mask_list.append(resize_mask(masks, (h_, w_)))

    # --- level 2: im2col 3x3-s2 on features[-1], CK=144 in its own call (no CK cross-padding)
    p2, ho2, wo2 = im2col_s2(features[-1])
    hw2 = p2.shape[1]
    hw2p = ((hw2 + 7) // 8) * 8
    w2l, b2l, g2l, be2l = params["input_proj"][2]
    out2 = conv_gn_multi(
        _pad_to(p2, (B, hw2p, p2.shape[2]))[None], w2l[None],
        b2l.reshape(1, 1, C), g2l.reshape(1, 1, C), be2l.reshape(1, 1, C),
        _row_mask_over_n(hw2p, hw2, cpg)[None])
    src_list.append(out2[0, :, :hw2, :].reshape(B, ho2, wo2, C))
    mask_list.append(resize_mask(masks, (ho2, wo2)))

    # --- level 3 depends on level-2 output and is only B*1 spatial rows: plain jnp
    #     (removing a whole pallas_call launch for a 2x576x64 matmul).
    p3, ho3, wo3 = im2col_s2(src_list[-1])
    w3l, b3l, g3l, be3l = params["input_proj"][3]
    src3 = conv_gn_ref(p3, w3l, b3l, g3l, be3l).reshape(B, ho3, wo3, C)
    src_list.append(src3)
    mask_list.append(resize_mask(masks, (ho3, wo3)))

    pos_list = [sine_pos(m) for m in mask_list]
    hs, init_ref, inter_refs = transformer_stub(src_list, mask_list, pos_list,
                                                params["query_embed"], kt)

    # reference for level 0 is init_reference, for lvl>0 it is inter_references[lvl-1]
    refs = jnp.concatenate([init_ref[None], inter_refs[:NUM_DEC_LAYERS - 1]], axis=0)
    logits_all, boxes_all = detection_heads(hs, refs, params["heads"])

    # global_avgpool(hs.detach()) with kernel (100,1) stride (100,1): computed but unused,
    # matching the reference forward (it is not returned in `out`).
    _feat = lax.stop_gradient(hs).reshape(hs.shape[0], hs.shape[1],
                                          NUM_QUERIES // 100, 100, HIDDEN).mean(axis=3)

    return {"logits_all": logits_all, "boxes_all": boxes_all}


# --------------------------------------------------------------------------
# Pure-JAX reference for the head kernel (correctness check)
# --------------------------------------------------------------------------
def heads_ref(hs, refs, head_params):
    cw, cb, w1, b1, w2, b2, w3, b3 = head_params
    logits = hs @ cw + cb
    x = jax.nn.relu(hs @ w1 + b1)
    x = jax.nn.relu(x @ w2 + b2)
    tmp = x @ w3 + b3
    r = jnp.clip(refs, 0.0, 1.0)
    inv = jnp.log(jnp.maximum(r, INV_SIG_EPS) / jnp.maximum(1.0 - r, INV_SIG_EPS))
    tmp = tmp.at[..., :2].add(inv)
    return logits, jax.nn.sigmoid(tmp)


if __name__ == "__main__":
    key = jax.random.PRNGKey(0)
    kp, kx, km, kf, kt1, kt2 = jax.random.split(key, 6)

    params = init_params(kp)

    # inputs: PyTorch forward takes NCHW images and [B, H, W] bool masks
    images = jax.random.normal(kx, (2, 3, 32, 32), jnp.float32)
    masks = jnp.zeros((2, 32, 32), dtype=bool)

    cpg = HIDDEN // NUM_GROUPS

    # --- conv+GroupNorm kernel vs pure-JAX reference (two padded + masked 1x1 levels) ---
    xa = jax.random.normal(kf, (2, 64, 8), jnp.float32)      # HW=64, CinK=8
    xb = jax.random.normal(km, (2, 16, 16), jnp.float32)     # HW=16, CinK=16
    hw_max, ck_max = 64, 16
    wA, bA, gA, beA = params["input_proj"][0]
    wB, bB, gB, beB = params["input_proj"][1]
    got = conv_gn_multi(
        jnp.stack([_pad_to(xa, (2, hw_max, ck_max)), _pad_to(xb, (2, hw_max, ck_max))]),
        jnp.stack([_pad_to(wA, (ck_max, HIDDEN)), wB]),
        jnp.stack([bA.reshape(1, -1), bB.reshape(1, -1)]),
        jnp.stack([gA.reshape(1, -1), gB.reshape(1, -1)]),
        jnp.stack([beA.reshape(1, -1), beB.reshape(1, -1)]),
        jnp.stack([_row_mask_over_n(hw_max, 64, cpg), _row_mask_over_n(hw_max, 16, cpg)]))
    errA = float(jnp.max(jnp.abs(got[0, :, :64, :] - conv_gn_ref(xa, wA, bA, gA, beA))))
    errB = float(jnp.max(jnp.abs(got[1, :, :16, :] - conv_gn_ref(xb, wB, bB, gB, beB))))
    assert errA < 2e-3 and errB < 2e-3, f"conv+GroupNorm kernel mismatch: {errA} {errB}"

    # --- detection-head kernel vs pure-JAX reference (bf16 MXU -> looser tolerance) ---
    hs_t = 0.5 * jax.random.normal(kt1, (NUM_DEC_LAYERS, 2, NUM_QUERIES, HIDDEN), jnp.float32)
    refs_t = jax.nn.sigmoid(jax.random.normal(kt2, (NUM_DEC_LAYERS, 2, NUM_QUERIES, 2),
                                              jnp.float32))
    lg, bx = detection_heads(hs_t, refs_t, params["heads"])
    lg_r, bx_r = heads_ref(hs_t, refs_t, params["heads"])
    err_lg = float(jnp.max(jnp.abs(lg - lg_r)))
    err_bx = float(jnp.max(jnp.abs(bx - bx_r)))
    assert err_lg < 2e-2, f"head kernel (logits) mismatch: {err_lg}"
    assert err_bx < 2e-2, f"head kernel (boxes) mismatch: {err_bx}"

    # --- full forward ---
    out = deformable_detr_forward(images, masks, params, key)
    jax.block_until_ready(out["logits_all"])
    jax.block_until_ready(out["boxes_all"])
    assert out["logits_all"].shape == (NUM_DEC_LAYERS, 2, NUM_QUERIES, NUM_CLASSES)
    assert out["boxes_all"].shape == (NUM_DEC_LAYERS, 2, NUM_QUERIES, 4)
    print("KERNEL_OK")
</pallas_src>

<mosaic_0001>
module attributes {stable_mosaic.version = 11 : i64} {
  func.func @_conv_gn_kernel(%arg0: i32, %arg1: memref<1x2x64x16xf32, #tpu.memory_space<vmem>>, %arg2: memref<1x16x64xf32, #tpu.memory_space<vmem>>, %arg3: memref<1x1x64xf32, #tpu.memory_space<vmem>>, %arg4: memref<1x1x64xf32, #tpu.memory_space<vmem>>, %arg5: memref<1x1x64xf32, #tpu.memory_space<vmem>>, %arg6: memref<64x64xf32, #tpu.memory_space<vmem>>, %arg7: memref<1x64x1xf32, #tpu.memory_space<vmem>>, %arg8: memref<1x2x64x64xf32, #tpu.memory_space<vmem>>) attributes {dimension_semantics = [#tpu.dimension_semantics<parallel>], iteration_bounds = array<i64: 2>, scalar_prefetch = 0 : i64, scratch_operands = 0 : i64, tpu.core_type = #tpu.core_type<tc>, window_params = [{transform_indices = @transform_0, window_bounds = array<i64: 1, 2, 64, 16>}, {transform_indices = @transform_1, window_bounds = array<i64: 1, 16, 64>}, {transform_indices = @transform_2, window_bounds = array<i64: 1, 1, 64>}, {transform_indices = @transform_3, window_bounds = array<i64: 1, 1, 64>}, {transform_indices = @transform_4, window_bounds = array<i64: 1, 1, 64>}, {pipeline_mode = #tpu.pipeline_mode<synchronous>, transform_indices = @transform_5, window_bounds = array<i64: 64, 64>}, {transform_indices = @transform_6, window_bounds = array<i64: 1, 64, 1>}, {transform_indices = @transform_7, window_bounds = array<i64: 1, 2, 64, 64>}]} {
    %c0 = arith.constant 0 : index
    %c0_0 = arith.constant 0 : index
    %c0_1 = arith.constant 0 : index
    %c0_2 = arith.constant 0 : index
    %0 = vector.load %arg1[%c0, %c0_0, %c0_1, %c0_2] : memref<1x2x64x16xf32, #tpu.memory_space<vmem>>, vector<1x2x64x16xf32>
    %1 = vector.shape_cast %0 : vector<1x2x64x16xf32> to vector<2x64x16xf32>
    %2 = vector.shape_cast %1 : vector<2x64x16xf32> to vector<128x16xf32>
    %c0_3 = arith.constant 0 : index
    %c0_4 = arith.constant 0 : index
    %c0_5 = arith.constant 0 : index
    %3 = vector.load %arg2[%c0_3, %c0_4, %c0_5] : memref<1x16x64xf32, #tpu.memory_space<vmem>>, vector<1x16x64xf32>
    %4 = vector.shape_cast %3 : vector<1x16x64xf32> to vector<16x64xf32>
    %cst = arith.constant dense<0.000000e+00> : vector<128x64xf32>
    %5 = tpu.matmul %2, %4, %cst {dimension_numbers = #tpu.dot_dimension_numbers<[1], [0], [0], [1], [0, 0, 1, 1], [], []>} : vector<128x16xf32>, vector<16x64xf32>, vector<128x64xf32> -> vector<128x64xf32>
    %c0_6 = arith.constant 0 : index
    %c0_7 = arith.constant 0 : index
    %c0_8 = arith.constant 0 : index
    %6 = vector.load %arg3[%c0_6, %c0_7, %c0_8] : memref<1x1x64xf32, #tpu.memory_space<vmem>>, vector<1x1x64xf32>
    %7 = vector.shape_cast %6 : vector<1x1x64xf32> to vector<1x64xf32>
    %8 = vector.broadcast %7 : vector<1x64xf32> to vector<128x64xf32>
    %9 = arith.addf %5, %8 : vector<128x64xf32>
    %10 = vector.shape_cast %9 : vector<128x64xf32> to vector<2x64x64xf32>
    %c0_9 = arith.constant 0 : index
    %c0_10 = arith.constant 0 : index
    %c0_11 = arith.constant 0 : index
    %11 = vector.load %arg7[%c0_9, %c0_10, %c0_11] : memref<1x64x1xf32, #tpu.memory_space<vmem>>, vector<1x64x1xf32>
    %12 = vector.shape_cast %11 : vector<1x64x1xf32> to vector<64x1xf32>
    %13 = vector.shape_cast %12 : vector<64x1xf32> to vector<1x64x1xf32>
    %14 = vector.broadcast %13 : vector<1x64x1xf32> to vector<2x64x64xf32>
    %15 = arith.mulf %10, %14 : vector<2x64x64xf32>
    %cst_12 = arith.constant dense<0.000000e+00> : vector<2x64xf32>
    %16 = vector.multi_reduction <add>, %15, %cst_12 [1] : vector<2x64x64xf32> to vector<2x64xf32>
    %17 = arith.mulf %15, %10 : vector<2x64x64xf32>
    %cst_13 = arith.constant dense<0.000000e+00> : vector<2x64xf32>
    %18 = vector.multi_reduction <add>, %17, %cst_13 [1] : vector<2x64x64xf32> to vector<2x64xf32>
    %c0_14 = arith.constant 0 : index
    %c0_15 = arith.constant 0 : index
    %19 = vector.load %arg6[%c0_14, %c0_15] : memref<64x64xf32, #tpu.memory_space<vmem>>, vector<64x64xf32>
    %cst_16 = arith.constant dense<0.000000e+00> : vector<2x64xf32>
    %20 = tpu.matmul %16, %19, %cst_16 {dimension_numbers = #tpu.dot_dimension_numbers<[1], [0], [0], [1], [0, 0, 1, 1], [], []>} : vector<2x64xf32>, vector<64x64xf32>, vector<2x64xf32> -> vector<2x64xf32>
    %cst_17 = arith.constant dense<0.000000e+00> : vector<2x64xf32>
    %21 = tpu.matmul %18, %19, %cst_17 {dimension_numbers = #tpu.dot_dimension_numbers<[1], [0], [0], [1], [0, 0, 1, 1], [], []>} : vector<2x64xf32>, vector<64x64xf32>, vector<2x64xf32> -> vector<2x64xf32>
    %22 = arith.mulf %20, %20 : vector<2x64xf32>
    %23 = arith.subf %21, %22 : vector<2x64xf32>
    %cst_18 = arith.constant 9.99999974E-6 : f32
    %24 = vector.broadcast %cst_18 : f32 to vector<2x64xf32>
    %25 = arith.addf %23, %24 : vector<2x64xf32>
    %26 = math.rsqrt %25 : vector<2x64xf32>
    %c0_19 = arith.constant 0 : index
    %c0_20 = arith.constant 0 : index
    %c0_21 = arith.constant 0 : index
    %27 = vector.load %arg4[%c0_19, %c0_20, %c0_21] : memref<1x1x64xf32, #tpu.memory_space<vmem>>, vector<1x1x64xf32>
    %28 = vector.shape_cast %27 : vector<1x1x64xf32> to vector<1x64xf32>
    %29 = vector.broadcast %28 : vector<1x64xf32> to vector<2x64xf32>
    %30 = arith.mulf %26, %29 : vector<2x64xf32>
    %c0_22 = arith.constant 0 : index
    %c0_23 = arith.constant 0 : index
    %c0_24 = arith.constant 0 : index
    %31 = vector.load %arg5[%c0_22, %c0_23, %c0_24] : memref<1x1x64xf32, #tpu.memory_space<vmem>>, vector<1x1x64xf32>
    %32 = vector.shape_cast %31 : vector<1x1x64xf32> to vector<1x64xf32>
    %33 = arith.mulf %20, %30 : vector<2x64xf32>
    %34 = vector.broadcast %32 : vector<1x64xf32> to vector<2x64xf32>
    %35 = arith.subf %34, %33 : vector<2x64xf32>
    %36 = vector.shape_cast %30 : vector<2x64xf32> to vector<2x1x64xf32>
    %37 = vector.broadcast %36 : vector<2x1x64xf32> to vector<2x64x64xf32>
    %38 = arith.mulf %10, %37 : vector<2x64x64xf32>
    %39 = vector.shape_cast %35 : vector<2x64xf32> to vector<2x1x64xf32>
    %40 = vector.broadcast %39 : vector<2x1x64xf32> to vector<2x64x64xf32>
    %41 = arith.addf %38, %40 : vector<2x64x64xf32>
    %c0_25 = arith.constant 0 : index
    %c0_26 = arith.constant 0 : index
    %c0_27 = arith.constant 0 : index
    %c0_28 = arith.constant 0 : index
    %42 = vector.load %arg8[%c0_25, %c0_26, %c0_27, %c0_28] : memref<1x2x64x64xf32, #tpu.memory_space<vmem>>, vector<1x2x64x64xf32>
    %43 = vector.shape_cast %42 : vector<1x2x64x64xf32> to vector<2x64x64xf32>
    %44 = vector.shape_cast %41 : vector<2x64x64xf32> to vector<1x2x64x64xf32>
    tpu.vector_store %arg8[%c0_25, %c0_26, %c0_27, %c0_28], %44 {strides = array<i32>} : memref<1x2x64x64xf32, #tpu.memory_space<vmem>>, vector<1x2x64x64xf32>,
    return
  }
  func.func @transform_0(%arg0: i32) -> (i32, i32, i32, i32) {
    %c0_i32 = arith.constant 0 : i32
    %c0_i32_0 = arith.constant 0 : i32
    %c0_i32_1 = arith.constant 0 : i32
    %c0_i32_2 = arith.constant 0 : i32
    return %arg0, %c0_i32, %c0_i32_0, %c0_i32_1 : i32, i32, i32, i32
  }
  func.func @transform_1(%arg0: i32) -> (i32, i32, i32) {
    %c0_i32 = arith.constant 0 : i32
    %c0_i32_0 = arith.constant 0 : i32
    %c0_i32_1 = arith.constant 0 : i32
    return %arg0, %c0_i32, %c0_i32_0 : i32, i32, i32
  }
  func.func @transform_2(%arg0: i32) -> (i32, i32, i32) {
    %c0_i32 = arith.constant 0 : i32
    %c0_i32_0 = arith.constant 0 : i32
    %c0_i32_1 = arith.constant 0 : i32
    return %arg0, %c0_i32, %c0_i32_0 : i32, i32, i32
  }
  func.func @transform_3(%arg0: i32) -> (i32, i32, i32) {
    %c0_i32 = arith.constant 0 : i32
    %c0_i32_0 = arith.constant 0 : i32
    %c0_i32_1 = arith.constant 0 : i32
    return %arg0, %c0_i32, %c0_i32_0 : i32, i32, i32
  }
  func.func @transform_4(%arg0: i32) -> (i32, i32, i32) {
    %c0_i32 = arith.constant 0 : i32
    %c0_i32_0 = arith.constant 0 : i32
    %c0_i32_1 = arith.constant 0 : i32
    return %arg0, %c0_i32, %c0_i32_0 : i32, i32, i32
  }
  func.func @transform_5(%arg0: i32) -> (i32, i32) {
    %c0_i32 = arith.constant 0 : i32
    %c0_i32_0 = arith.constant 0 : i32
    %c0_i32_1 = arith.constant 0 : i32
    return %c0_i32, %c0_i32_0 : i32, i32
  }
  func.func @transform_6(%arg0: i32) -> (i32, i32, i32) {
    %c0_i32 = arith.constant 0 : i32
    %c0_i32_0 = arith.constant 0 : i32
    %c0_i32_1 = arith.constant 0 : i32
    return %arg0, %c0_i32, %c0_i32_0 : i32, i32, i32
  }
  func.func @transform_7(%arg0: i32) -> (i32, i32, i32, i32) {
    %c0_i32 = arith.constant 0 : i32
    %c0_i32_0 = arith.constant 0 : i32
    %c0_i32_1 = arith.constant 0 : i32
    %c0_i32_2 = arith.constant 0 : i32
    return %arg0, %c0_i32, %c0_i32_0, %c0_i32_1 : i32, i32, i32, i32
  }
}

</mosaic_0001>

<llo_original>
// kernel: tpu_custom_call.1
$region0: #{tpu_custom_call.1}
  #allocation0 [shape = 'u32[]', space=smem, size = 0x4, offset = 0x4, fixed_abs, tag = 'smem constant byte address 0x4 - core index']
  #allocation1 [shape = 'u32[144,128]{1,0:T(1,128)}', space=vmem, size = 0x12000, scoped, tag = 'internal scratch']
  %s0 = inlined_call_operand.vmem [shape: f32[2,2,64,16], index: 0, kind: input, shape index: {}]
  %s1 = inlined_call_operand.vmem [shape: f32[2,16,64], index: 1, kind: input, shape index: {}]
  %s2 = inlined_call_operand.vmem [shape: f32[2,1,64], index: 2, kind: input, shape index: {}]
  %s3 = inlined_call_operand.vmem [shape: f32[2,1,64], index: 3, kind: input, shape index: {}]
  %s4 = inlined_call_operand.vmem [shape: f32[2,1,64], index: 4, kind: input, shape index: {}]
  %s5 = inlined_call_operand.vmem [shape: f32[64,64], index: 5, kind: input, shape index: {}]
  %s6 = inlined_call_operand.vmem [shape: f32[2,64,1], index: 6, kind: input, shape index: {}]
  %s7 = inlined_call_operand.hbm [shape: f32[2,2,64,64], index: 7, kind: output, shape index: {}]
  %s8 = sld [smem:[#allocation0]]
  $region61: #{tpu_custom_call.1} parent=0
    _
  %s10 = ssub.s32 1, %s8
  %s11 = scalar_select 0, %s10, %s8
  $region1: #{tpu_custom_call.1} parent=0
    #allocation2 [shape = 'u8[131072]{0}', space=vmem, size = 0x20000, scoped, tag = 'output window, operand 0']
    #allocation3 [shape = 's32[2]{0}', space=sflag, size = 0x8, scoped, tag = 'scoped memory for tpu_custom_call.1']
    %12 = vsyncpa [#allocation3], 0
    %s13 = scalar_lea.sflag [#allocation3], 1
    %14 = vsyncpa %s13, 0
    loop: start=0, step=1, limit=4
    $region2: #{tpu_custom_call.1} parent=1 // loop_pre_header
      _
    $region3: #{tpu_custom_call.1} parent=1 // loop_header
      %s16 = sphi 0, %s20
      %p17 = scmp.ge.s32.totalorder %s16, 4
      %s26 = sphi 0, %s28
      %s29 = sphi 0, %s26
      %s30 = sphi 0, %s29
      %s46 = sphi 0, %s30
      %s52 = sphi 0, %s54
      %s55 = sphi 0, %s52
      %s56 = sphi 0, %s55
      %s72 = sphi 0, %s56
      %s78 = sphi 0, %s80
      %s81 = sphi 0, %s78
      %s82 = sphi 0, %s81
      %s98 = sphi 0, %s82
      %s104 = sphi 0, %s106
      %s107 = sphi 0, %s104
      %s108 = sphi 0, %s107
      %s124 = sphi 0, %s108
      %s130 = sphi 0, %s132
      %s133 = sphi 0, %s130
      %s134 = sphi 0, %s133
      %s150 = sphi 0, %s134
      %s154 = sphi 0, %s154
      %s156 = sphi 0, %s154
      %s157 = sphi 0, %s156
      %s171 = sphi 0, %s157
      %s177 = sphi 0, %s179
      %s180 = sphi 0, %s177
      %s181 = sphi 0, %s180
      %s197 = sphi 0, %s181
      %s203 = sphi 0, %s205
      %s206 = sphi 0, %s203
      %s207 = sphi 0, %s206
      %s223 = sphi 0, %s207
    $region4: #{tpu_custom_call.1} parent=1 // loop_header_branch
      %19 = sbr.rel (%p17) target = $region8
    $region5: #{tpu_custom_call.1} parent=1 // loop_body
      %s21 = ssub.s32 %s16, 1
      %s22 = ssub.s32 %s16, 2
      %s23 = sadd.s32 %s16, 1
      %s24 = ssub.s32 %s16, %s23
      %p25 = scmp.eq.s32.totalorder %s24, 0
      %s27 = sadd.s32 %s26, 1
      %s28 = scalar_select %p25, %s26, %s27
      %p31 = pneg %p25
      %p32 = scmp.eq.s32.totalorder %s16, 1
      %p33 = por %p31, %p32
      %p34 = scmp.ne.s32.totalorder %s26, %s29
      %p35 = scmp.eq.s32.totalorder %s16, 0
      %p36 = por %p34, %p35
      %p37 = scmp.ne.s32.totalorder %s26, %s29
      %p38 = scmp.eq.s32.totalorder %s21, 1
      %p39 = por %p37, %p38
      %p40 = scmp.ne.s32.totalorder %s29, %s30
      %p41 = scmp.eq.s32.totalorder %s21, 0
      %p42 = por %p40, %p41
      %p43 = scmp.ne.s32.totalorder %s29, %s30
      %p44 = scmp.eq.s32.totalorder %s22, 1
      %p45 = por %p43, %p44
      %p47 = scmp.ne.s32.totalorder %s30, %s46
      %p48 = scmp.eq.s32.totalorder %s22, 0
      %p49 = por %p47, %p48
      %s50 = ssub.s32 %s16, %s23
      %p51 = scmp.eq.s32.totalorder %s50, 0
      %s53 = sadd.s32 %s52, 1
      %s54 = scalar_select %p51, %s52, %s53
      %p57 = pneg %p51
      %p58 = scmp.eq.s32.totalorder %s16, 1
      %p59 = por %p57, %p58
      %p60 = scmp.ne.s32.totalorder %s52, %s55
      %p61 = scmp.eq.s32.totalorder %s16, 0
      %p62 = por %p60, %p61
      %p63 = scmp.ne.s32.totalorder %s52, %s55
      %p64 = scmp.eq.s32.totalorder %s21, 1
      %p65 = por %p63, %p64
      %p66 = scmp.ne.s32.totalorder %s55, %s56
      %p67 = scmp.eq.s32.totalorder %s21, 0
      %p68 = por %p66, %p67
      %p69 = scmp.ne.s32.totalorder %s55, %s56
      %p70 = scmp.eq.s32.totalorder %s22, 1
      %p71 = por %p69, %p70
      %p73 = scmp.ne.s32.totalorder %s56, %s72
      %p74 = scmp.eq.s32.totalorder %s22, 0
      %p75 = por %p73, %p74
      %s76 = ssub.s32 %s16, %s23
      %p77 = scmp.eq.s32.totalorder %s76, 0
      %s79 = sadd.s32 %s78, 1
      %s80 = scalar_select %p77, %s78, %s79
      %p83 = pneg %p77
      %p84 = scmp.eq.s32.totalorder %s16, 1
      %p85 = por %p83, %p84
      %p86 = scmp.ne.s32.totalorder %s78, %s81
      %p87 = scmp.eq.s32.totalorder %s16, 0
      %p88 = por %p86, %p87
      %p89 = scmp.ne.s32.totalorder %s78, %s81
      %p90 = scmp.eq.s32.totalorder %s21, 1
      %p91 = por %p89, %p90
      %p92 = scmp.ne.s32.totalorder %s81, %s82
      %p93 = scmp.eq.s32.totalorder %s21, 0
      %p94 = por %p92, %p93
      %p95 = scmp.ne.s32.totalorder %s81, %s82
      %p96 = scmp.eq.s32.totalorder %s22, 1
      %p97 = por %p95, %p96
      %p99 = scmp.ne.s32.totalorder %s82, %s98
      %p100 = scmp.eq.s32.totalorder %s22, 0
      %p101 = por %p99, %p100
      %s102 = ssub.s32 %s16, %s23
      %p103 = scmp.eq.s32.totalorder %s102, 0
      %s105 = sadd.s32 %s104, 1
      %s106 = scalar_select %p103, %s104, %s105
      %p109 = pneg %p103
      %p110 = scmp.eq.s32.totalorder %s16, 1
      %p111 = por %p109, %p110
      %p112 = scmp.ne.s32.totalorder %s104, %s107
      %p113 = scmp.eq.s32.totalorder %s16, 0
      %p114 = por %p112, %p113
      %p115 = scmp.ne.s32.totalorder %s104, %s107
      %p116 = scmp.eq.s32.totalorder %s21, 1
      %p117 = por %p115, %p116
      %p118 = scmp.ne.s32.totalorder %s107, %s108
      %p119 = scmp.eq.s32.totalorder %s21, 0
      %p120 = por %p118, %p119
      %p121 = scmp.ne.s32.totalorder %s107, %s108
      %p122 = scmp.eq.s32.totalorder %s22, 1
      %p123 = por %p121, %p122
      %p125 = scmp.ne.s32.totalorder %s108, %s124
      %p126 = scmp.eq.s32.totalorder %s22, 0
      %p127 = por %p125, %p126
      %s128 = ssub.s32 %s16, %s23
      %p129 = scmp.eq.s32.totalorder %s128, 0
      %s131 = sadd.s32 %s130, 1
      %s132 = scalar_select %p129, %s130, %s131
      %p135 = pneg %p129
      %p136 = scmp.eq.s32.totalorder %s16, 1
      %p137 = por %p135, %p136
      %p138 = scmp.ne.s32.totalorder %s130, %s133
      %p139 = scmp.eq.s32.totalorder %s16, 0
      %p140 = por %p138, %p139
      %p141 = scmp.ne.s32.totalorder %s130, %s133
      %p142 = scmp.eq.s32.totalorder %s21, 1
      %p143 = por %p141, %p142
      %p144 = scmp.ne.s32.totalorder %s133, %s134
      %p145 = scmp.eq.s32.totalorder %s21, 0
      %p146 = por %p144, %p145
      %p147 = scmp.ne.s32.totalorder %s133, %s134
      %p148 = scmp.eq.s32.totalorder %s22, 1
      %p149 = por %p147, %p148
      %p151 = scmp.ne.s32.totalorder %s134, %s150
      %p152 = scmp.eq.s32.totalorder %s22, 0
      %p153 = por %p151, %p152
      %s155 = sadd.s32 %s154, 1
      %p158 = scmp.eq.s32.totalorder %s16, 1
      %p159 = scmp.ne.s32.totalorder %s154, %s156
      %p160 = scmp.eq.s32.totalorder %s16, 0
      %p161 = por %p159, %p160
      %p162 = scmp.ne.s32.totalorder %s154, %s156
      %p163 = scmp.eq.s32.totalorder %s21, 1
      %p164 = por %p162, %p163
      %p165 = scmp.ne.s32.totalorder %s156, %s157
      %p166 = scmp.eq.s32.totalorder %s21, 0
      %p167 = por %p165, %p166
      %p168 = scmp.ne.s32.totalorder %s156, %s157
      %p169 = scmp.eq.s32.totalorder %s22, 1
      %p170 = por %p168, %p169
      %p172 = scmp.ne.s32.totalorder %s157, %s171
      %p173 = scmp.eq.s32.totalorder %s22, 0
      %p174 = por %p172, %p173
      %s175 = ssub.s32 %s16, %s23
      %p176 = scmp.eq.s32.totalorder %s175, 0
      %s178 = sadd.s32 %s177, 1
      %s179 = scalar_select %p176, %s177, %s178
      %p182 = pneg %p176
      %p183 = scmp.eq.s32.totalorder %s16, 1
      %p184 = por %p182, %p183
      %p185 = scmp.ne.s32.totalorder %s177, %s180
      %p186 = scmp.eq.s32.totalorder %s16, 0
      %p187 = por %p185, %p186
      %p188 = scmp.ne.s32.totalorder %s177, %s180
      %p189 = scmp.eq.s32.totalorder %s21, 1
      %p190 = por %p188, %p189
      %p191 = scmp.ne.s32.totalorder %s180, %s181
      %p192 = scmp.eq.s32.totalorder %s21, 0
      %p193 = por %p191, %p192
      %p194 = scmp.ne.s32.totalorder %s180, %s181
      %p195 = scmp.eq.s32.totalorder %s22, 1
      %p196 = por %p194, %p195
      %p198 = scmp.ne.s32.totalorder %s181, %s197
      %p199 = scmp.eq.s32.totalorder %s22, 0
      %p200 = por %p198, %p199
      %s201 = ssub.s32 %s16, %s23
      %p202 = scmp.eq.s32.totalorder %s201, 0
      %s204 = sadd.s32 %s203, 1
      %s205 = scalar_select %p202, %s203, %s204
      %p208 = pneg %p202
      %p209 = scmp.eq.s32.totalorder %s16, 1
      %p210 = por %p208, %p209
      %p211 = scmp.ne.s32.totalorder %s203, %s206
      %p212 = scmp.eq.s32.totalorder %s16, 0
      %p213 = por %p211, %p212
      %p214 = scmp.ne.s32.totalorder %s203, %s206
      %p215 = scmp.eq.s32.totalorder %s21, 1
      %p216 = por %p214, %p215
      %p217 = scmp.ne.s32.totalorder %s206, %s207
      %p218 = scmp.eq.s32.totalorder %s21, 0
      %p219 = por %p217, %p218
      %p220 = scmp.ne.s32.totalorder %s206, %s207
      %p221 = scmp.eq.s32.totalorder %s22, 1
      %p222 = por %p220, %p221
      %p224 = scmp.ne.s32.totalorder %s207, %s223
      %p225 = scmp.eq.s32.totalorder %s22, 0
      %p226 = por %p224, %p225
      %p227 = scmp.le.s32.totalorder 1, %s16
      %p228 = scmp.lt.s32.totalorder %s16, 3
      %p229 = pnand %p227, %p228
      %p230 = pneg %p229
      // Predicated region
      $region9: #{tpu_custom_call.1} parent=5 // pred_check
        _
      $region10: #{tpu_custom_call.1} parent=5 // pred_check_branch
        %232 = sbr.rel (%p229) target = $region12
      $region11: #{tpu_custom_call.1} parent=5 // pred_region
        %s233 = ssub.s32 %s16, 1
        // Predicated region
        $region13: #{tpu_custom_call.1} parent=11 // pred_check
          %p234 = pneg %p167
        $region14: #{tpu_custom_call.1} parent=11 // pred_check_branch
          %236 = sbr.rel (%p234) target = $region16
        $region15: #{tpu_custom_call.1} parent=11 // pred_region
          _
        $region16: #{tpu_custom_call.1} parent=11 // pred_fallthru
          _
      $region12: #{tpu_custom_call.1} parent=5 // pred_fallthru
        _
      %p237 = scmp.lt.s32.totalorder %s16, 2
      // Predicated region
      $region17: #{tpu_custom_call.1} parent=5 // pred_check
        %p238 = pneg %p237
      $region18: #{tpu_custom_call.1} parent=5 // pred_check_branch
        %240 = sbr.rel (%p238) target = $region20
      $region19: #{tpu_custom_call.1} parent=5 // pred_region
        // Predicated region
        $region21: #{tpu_custom_call.1} parent=19 // pred_check
          %p241 = pneg %p36
        $region22: #{tpu_custom_call.1} parent=19 // pred_check_branch
          %243 = sbr.rel (%p241) target = $region24
        $region23: #{tpu_custom_call.1} parent=19 // pred_region
          %p244 = scmp.lt.s32.totalorder %s16, 1
          %s245 = scalar_select %p244, %s16, 1
          %s246 = smul.addr %s245, 16
          %s247 = smul.addr %s246, 8
          %s248 = scalar_lea.vmem %s0, %s247
        $region24: #{tpu_custom_call.1} parent=19 // pred_fallthru
          _
        // Predicated region
        $region25: #{tpu_custom_call.1} parent=19 // pred_check
          %p249 = pneg %p62
        $region26: #{tpu_custom_call.1} parent=19 // pred_check_branch
          %251 = sbr.rel (%p249) target = $region28
        $region27: #{tpu_custom_call.1} parent=19 // pred_region
          %p252 = scmp.lt.s32.totalorder %s16, 1
          %s253 = scalar_select %p252, %s16, 1
          %s254 = smul.addr %s253, 2
          %s255 = smul.addr %s254, 8
          %s256 = scalar_lea.vmem %s1, %s255
        $region28: #{tpu_custom_call.1} parent=19 // pred_fallthru
          _
        // Predicated region
        $region29: #{tpu_custom_call.1} parent=19 // pred_check
          %p257 = pneg %p88
        $region30: #{tpu_custom_call.1} parent=19 // pred_check_branch
          %259 = sbr.rel (%p257) target = $region32
        $region31: #{tpu_custom_call.1} parent=19 // pred_region
          %p260 = scmp.lt.s32.totalorder %s16, 1
          %s261 = scalar_select %p260, %s16, 1
          %s262 = scalar_lea.vmem %s2, %s261
        $region32: #{tpu_custom_call.1} parent=19 // pred_fallthru
          _
        // Predicated region
        $region33: #{tpu_custom_call.1} parent=19 // pred_check
          %p263 = pneg %p114
        $region34: #{tpu_custom_call.1} parent=19 // pred_check_branch
          %265 = sbr.rel (%p263) target = $region36
        $region35: #{tpu_custom_call.1} parent=19 // pred_region
          %p266 = scmp.lt.s32.totalorder %s16, 1
          %s267 = scalar_select %p266, %s16, 1
          %s268 = scalar_lea.vmem %s3, %s267
        $region36: #{tpu_custom_call.1} parent=19 // pred_fallthru
          _
        // Predicated region
        $region37: #{tpu_custom_call.1} parent=19 // pred_check
          %p269 = pneg %p140
        $region38: #{tpu_custom_call.1} parent=19 // pred_check_branch
          %271 = sbr.rel (%p269) target = $region40
        $region39: #{tpu_custom_call.1} parent=19 // pred_region
          %p272 = scmp.lt.s32.totalorder %s16, 1
          %s273 = scalar_select %p272, %s16, 1
          %s274 = scalar_lea.vmem %s4, %s273
        $region40: #{tpu_custom_call.1} parent=19 // pred_fallthru
          _
        // Predicated region
        $region41: #{tpu_custom_call.1} parent=19 // pred_check
          %p275 = pneg %p187
        $region42: #{tpu_custom_call.1} parent=19 // pred_check_branch
          %277 = sbr.rel (%p275) target = $region44
        $region43: #{tpu_custom_call.1} parent=19 // pred_region
          %p278 = scmp.lt.s32.totalorder %s16, 1
          %s279 = scalar_select %p278, %s16, 1
          %s280 = smul.addr %s279, 8
          %s281 = smul.addr %s280, 8
          %s282 = scalar_lea.vmem %s6, %s281
        $region44: #{tpu_custom_call.1} parent=19 // pred_fallthru
          _
      $region20: #{tpu_custom_call.1} parent=5 // pred_fallthru
        _
      %p283 = scmp.le.s32.totalorder 1, %s16
      %p284 = scmp.lt.s32.totalorder %s16, 3
      %p285 = pnand %p283, %p284
      %p286 = pneg %p285
      // Predicated region
      $region45: #{tpu_custom_call.1} parent=5 // pred_check
        _
      $region46: #{tpu_custom_call.1} parent=5 // pred_check_branch
        %288 = sbr.rel (%p285) target = $region48
      $region47: #{tpu_custom_call.1} parent=5 // pred_region
        %s289 = ssub.s32 %s16, 1
        %p290 = scmp.lt.s32.totalorder %s21, 1
        %s291 = scalar_select %p290, %s21, 1
        %s292 = smul.addr %s291, 16
        %s293 = smul.addr %s292, 8
        %s294 = scalar_lea.vmem %s0, %s293
        %p295 = pneg %p42
        %p296 = pneg %p39
        %p297 = scmp.lt.s32.totalorder %s21, 1
        %s298 = scalar_select %p297, %s21, 1
        %s299 = smul.addr %s298, 2
        %s300 = smul.addr %s299, 8
        %s301 = scalar_lea.vmem %s1, %s300
        %p302 = pneg %p68
        %p303 = pneg %p65
        %p304 = scmp.lt.s32.totalorder %s21, 1
        %s305 = scalar_select %p304, %s21, 1
        %s306 = scalar_lea.vmem %s2, %s305
        %p307 = pneg %p94
        %p308 = pneg %p91
        %p309 = scmp.lt.s32.totalorder %s21, 1
        %s310 = scalar_select %p309, %s21, 1
        %s311 = scalar_lea.vmem %s3, %s310
        %p312 = pneg %p120
        %p313 = pneg %p117
        %p314 = scmp.lt.s32.totalorder %s21, 1
        %s315 = scalar_select %p314, %s21, 1
        %s316 = scalar_lea.vmem %s4, %s315
        %p317 = pneg %p146
        %p318 = pneg %p143
        %p319 = pneg %p167
        %p320 = pneg %p164
        %p321 = scmp.lt.s32.totalorder %s21, 1
        %s322 = scalar_select %p321, %s21, 1
        %s323 = smul.addr %s322, 8
        %s324 = smul.addr %s323, 8
        %s325 = scalar_lea.vmem %s6, %s324
        %p326 = pneg %p193
        %p327 = pneg %p190
        %p328 = pneg %p219
        %p329 = pneg %p216
        %s330 = sand.u32 %s206, 1
        %s331 = scalar_lea.sflag [#allocation3], %s330
        %s332 = sand.u32 %s206, 1
        %s333 = smul.addr %s332, 128
        %s334 = scalar_lea.vmem [#allocation2], %s333
        %p335 = scmp.lt.s32.totalorder %s21, 1
        %s336 = scalar_select %p335, %s21, 1
        %s337 = smul.addr %s336, 16
        %s338 = smul.addr %s337, 8
        %s339 = scalar_lea.vmem %s0, %s338
        %p340 = scmp.lt.s32.totalorder %s21, 1
        %s341 = scalar_select %p340, %s21, 1
        %s342 = smul.addr %s341, 2
        %s343 = smul.addr %s342, 8
        %s344 = scalar_lea.vmem %s1, %s343
        %p345 = scmp.lt.s32.totalorder %s21, 1
        %s346 = scalar_select %p345, %s21, 1
        %s347 = scalar_lea.vmem %s2, %s346
        %p348 = scmp.lt.s32.totalorder %s21, 1
        %s349 = scalar_select %p348, %s21, 1
        %s350 = scalar_lea.vmem %s3, %s349
        %p351 = scmp.lt.s32.totalorder %s21, 1
        %s352 = scalar_select %p351, %s21, 1
        %s353 = scalar_lea.vmem %s4, %s352
        %p354 = scmp.lt.s32.totalorder %s21, 1
        %s355 = scalar_select %p354, %s21, 1
        %s356 = smul.addr %s355, 8
        %s357 = smul.addr %s356, 8
        %s358 = scalar_lea.vmem %s6, %s357
        %v359 = vld [vmem:[%s339] sm:$0xff]
        %v360 = vld [vmem:[%s339 + $0x8] sm:$0xff]
        %v361 = vld [vmem:[%s339 + $0x10] sm:$0xff]
        %v362 = vld [vmem:[%s339 + $0x18] sm:$0xff]
        %v363 = vld [vmem:[%s339 + $0x20] sm:$0xff]
        %v364 = vld [vmem:[%s339 + $0x28] sm:$0xff]
        %v365 = vld [vmem:[%s339 + $0x30] sm:$0xff]
        %v366 = vld [vmem:[%s339 + $0x38] sm:$0xff]
        %v367 = vld [vmem:[%s339 + $0x40] sm:$0xff]
        %v368 = vld [vmem:[%s339 + $0x48] sm:$0xff]
        %v369 = vld [vmem:[%s339 + $0x50] sm:$0xff]
        %v370 = vld [vmem:[%s339 + $0x58] sm:$0xff]
        %v371 = vld [vmem:[%s339 + $0x60] sm:$0xff]
        %v372 = vld [vmem:[%s339 + $0x68] sm:$0xff]
        %v373 = vld [vmem:[%s339 + $0x70] sm:$0xff]
        %v374 = vld [vmem:[%s339 + $0x78] sm:$0xff]
        %v375 = vld [vmem:[%s344] sm:$0xff]
        %v376 = vld [vmem:[%s344 + $0x8] sm:$0xff]
        %v377 = vld [vmem:[%s347] sm:$0x1]
        %v379 = vlaneseq
        %v380 = vshrl.u32 %v379, 7
        %v381 = vsub.s32 0, %v380
        %v382 = vrot.slane %v377, %v381
        %vm384 = vcmask 130048
        %v386 = vsel %vm384, %v359, 0
        %v389 = vsel %vm384, %v360, 0
        %v392 = vsel %vm384, %v361, 0
        %v395 = vsel %vm384, %v362, 0
        %v398 = vsel %vm384, %v363, 0
        %v401 = vsel %vm384, %v364, 0
        %v404 = vsel %vm384, %v365, 0
        %v407 = vsel %vm384, %v366, 0
        %v410 = vsel %vm384, %v367, 0
        %v413 = vsel %vm384, %v368, 0
        %v416 = vsel %vm384, %v369, 0
        %v419 = vsel %vm384, %v370, 0
        %v422 = vsel %vm384, %v371, 0
        %v425 = vsel %vm384, %v372, 0
        %v428 = vsel %vm384, %v373, 0
        %v431 = vsel %vm384, %v374, 0
        %433 = vmatprep.subr.mxu0 0.0
        %434 = vmatpush1.msra.mxu0 %v375
        %435 = vmatprep.subr.mxu0 0.0
        %436 = vmatpush1.msra.mxu0 %v376
        %437 = vmatprep.subr.mxu0 0.0
        %438 = vmatpush1.msra.mxu0 0.0
        %439 = vmatprep.subr.mxu0 0.0
        %440 = vmatpush1.msra.mxu0 0.0
        %441 = vmatprep.subr.mxu0 0.0
        %442 = vmatpush1.msra.mxu0 0.0
        %443 = vmatprep.subr.mxu0 0.0
        %444 = vmatpush1.msra.mxu0 0.0
        %445 = vmatprep.subr.mxu0 0.0
        %446 = vmatpush1.msra.mxu0 0.0
        %447 = vmatprep.subr.mxu0 0.0
        %448 = vmatpush1.msra.mxu0 0.0
        %449 = vmatprep.subr.mxu0 0.0
        %450 = vmatpush1.msra.mxu0 0.0
        %451 = vmatprep.subr.mxu0 0.0
        %452 = vmatpush1.msra.mxu0 0.0
        %453 = vmatprep.subr.mxu0 0.0
        %454 = vmatpush1.msra.mxu0 0.0
        %455 = vmatprep.subr.mxu0 0.0
        %456 = vmatpush1.msra.mxu0 0.0
        %457 = vmatprep.subr.mxu0 0.0
        %458 = vmatpush1.msra.mxu0 0.0
        %459 = vmatprep.subr.mxu0 0.0
        %460 = vmatpush1.msra.mxu0 0.0
        %461 = vmatprep.subr.mxu0 0.0
        %462 = vmatpush1.msra.mxu0 0.0
        %463 = vmatprep.subr.mxu0 0.0
        %464 = vmatpush1.msra.mxu0 0.0
        %465 = vmatprep.subr.mxu0 0.0
        %466 = vmatpush1.msra.mxu0 0.0
        %467 = vmatprep.subr.mxu0 0.0
        %468 = vmatpush1.msra.mxu0 0.0
        %469 = vmatprep.subr.mxu0 0.0
        %470 = vmatpush1.msra.mxu0 0.0
        %471 = vmatprep.subr.mxu0 0.0
        %472 = vmatpush1.msra.mxu0 0.0
        %473 = vmatprep.subr.mxu0 0.0
        %474 = vmatpush1.msra.mxu0 0.0
        %475 = vmatprep.subr.mxu0 0.0
        %476 = vmatpush1.msra.mxu0 0.0
        %477 = vmatprep.subr.mxu0 0.0
        %478 = vmatpush1.msra.mxu0 0.0
        %479 = vmatprep.subr.mxu0 0.0
        %480 = vmatpush1.msra.mxu0 0.0
        %481 = vmatprep.subr.mxu0 0.0
        %482 = vmatpush1.msra.mxu0 0.0
        %483 = vmatprep.subr.mxu0 0.0
        %484 = vmatpush1.msra.mxu0 0.0
        %485 = vmatprep.subr.mxu0 0.0
        %486 = vmatpush1.msra.mxu0 0.0
        %487 = vmatprep.subr.mxu0 0.0
        %488 = vmatpush1.msra.mxu0 0.0
        %489 = vmatprep.subr.mxu0 0.0
        %490 = vmatpush1.msra.mxu0 0.0
        %491 = vmatprep.subr.mxu0 0.0
        %492 = vmatpush1.msra.mxu0 0.0
        %493 = vmatprep.subr.mxu0 0.0
        %494 = vmatpush1.msra.mxu0 0.0
        %495 = vmatprep.subr.mxu0 0.0
        %496 = vmatpush1.msra.mxu0 0.0
        %497 = vmatprep.mubr.f32.mxu0 0.0
        %498 = vmatmul.mubr.f32.gmra.mrb[0].mxu0 %v386
        %v499 = vpop.f32.mrb[0].mxu0
        %v500 = vadd.f32 %v382, %v499
        %v501 = vpop.f32.mrb[0].mxu0
        %502 = vmatprep.mubr.f32.mxu0 0.0
        %503 = vmatmul.mubr.f32.gmra.mrb[0].mxu0 %v389
        %v504 = vpop.f32.mrb[0].mxu0
        %v505 = vadd.f32 %v382, %v504
        %v506 = vpop.f32.mrb[0].mxu0
        %507 = vmatprep.mubr.f32.mxu0 0.0
        %508 = vmatmul.mubr.f32.gmra.mrb[0].mxu0 %v392
        %v509 = vpop.f32.mrb[0].mxu0
        %v510 = vadd.f32 %v382, %v509
        %v511 = vpop.f32.mrb[0].mxu0
        %512 = vmatprep.mubr.f32.mxu0 0.0
        %513 = vmatmul.mubr.f32.gmra.mrb[0].mxu0 %v395
        %v514 = vpop.f32.mrb[0].mxu0
        %v515 = vadd.f32 %v382, %v514
        %v516 = vpop.f32.mrb[0].mxu0
        %517 = vmatprep.mubr.f32.mxu0 0.0
        %518 = vmatmul.mubr.f32.gmra.mrb[0].mxu0 %v398
        %v519 = vpop.f32.mrb[0].mxu0
        %v520 = vadd.f32 %v382, %v519
        %v521 = vpop.f32.mrb[0].mxu0
        %522 = vmatprep.mubr.f32.mxu0 0.0
        %523 = vmatmul.mubr.f32.gmra.mrb[0].mxu0 %v401
        %v524 = vpop.f32.mrb[0].mxu0
        %v525 = vadd.f32 %v382, %v524
        %v526 = vpop.f32.mrb[0].mxu0
        %527 = vmatprep.mubr.f32.mxu0 0.0
        %528 = vmatmul.mubr.f32.gmra.mrb[0].mxu0 %v404
        %v529 = vpop.f32.mrb[0].mxu0
        %v530 = vadd.f32 %v382, %v529
        %v531 = vpop.f32.mrb[0].mxu0
        %532 = vmatprep.mubr.f32.mxu0 0.0
        %533 = vmatmul.mubr.f32.gmra.mrb[0].mxu0 %v407
        %v534 = vpop.f32.mrb[0].mxu0
        %v535 = vadd.f32 %v382, %v534
        %v536 = vpop.f32.mrb[0].mxu0
        %537 = vmatprep.mubr.f32.mxu0 0.0
        %538 = vmatmul.mubr.f32.gmra.mrb[0].mxu0 %v410
        %v539 = vpop.f32.mrb[0].mxu0
        %v540 = vadd.f32 %v382, %v539
        %v541 = vpop.f32.mrb[0].mxu0
        %542 = vmatprep.mubr.f32.mxu0 0.0
        %543 = vmatmul.mubr.f32.gmra.mrb[0].mxu0 %v413
        %v544 = vpop.f32.mrb[0].mxu0
        %v545 = vadd.f32 %v382, %v544
        %v546 = vpop.f32.mrb[0].mxu0
        %547 = vmatprep.mubr.f32.mxu0 0.0
        %548 = vmatmul.mubr.f32.gmra.mrb[0].mxu0 %v416
        %v549 = vpop.f32.mrb[0].mxu0
        %v550 = vadd.f32 %v382, %v549
        %v551 = vpop.f32.mrb[0].mxu0
        %552 = vmatprep.mubr.f32.mxu0 0.0
        %553 = vmatmul.mubr.f32.gmra.mrb[0].mxu0 %v419
        %v554 = vpop.f32.mrb[0].mxu0
        %v555 = vadd.f32 %v382, %v554
        %v556 = vpop.f32.mrb[0].mxu0
        %557 = vmatprep.mubr.f32.mxu0 0.0
        %558 = vmatmul.mubr.f32.gmra.mrb[0].mxu0 %v422
        %v559 = vpop.f32.mrb[0].mxu0
        %v560 = vadd.f32 %v382, %v559
        %v561 = vpop.f32.mrb[0].mxu0
        %562 = vmatprep.mubr.f32.mxu0 0.0
        %563 = vmatmul.mubr.f32.gmra.mrb[0].mxu0 %v425
        %v564 = vpop.f32.mrb[0].mxu0
        %v565 = vadd.f32 %v382, %v564
        %v566 = vpop.f32.mrb[0].mxu0
        %567 = vmatprep.mubr.f32.mxu0 0.0
        %568 = vmatmul.mubr.f32.gmra.mrb[0].mxu0 %v428
        %v569 = vpop.f32.mrb[0].mxu0
        %v570 = vadd.f32 %v382, %v569
        %v571 = vpop.f32.mrb[0].mxu0
        %572 = vmatprep.mubr.f32.mxu0 0.0
        %573 = vmatmul.mubr.f32.gmra.mrb[0].mxu0 %v431
        %v574 = vpop.f32.mrb[0].mxu0
        %v575 = vadd.f32 %v382, %v574
        %v576 = vpop.f32.mrb[0].mxu0
        %577 = vdwg.mxu0
        %v578 = vld [vmem:[%s358] sm:$0xff]
        %v579 = vld [vmem:[%s358 + $0x8] sm:$0xff]
        %v580 = vld [vmem:[%s358 + $0x10] sm:$0xff]
        %v581 = vld [vmem:[%s358 + $0x18] sm:$0xff]
        %v582 = vld [vmem:[%s358 + $0x20] sm:$0xff]
        %v583 = vld [vmem:[%s358 + $0x28] sm:$0xff]
        %v584 = vld [vmem:[%s358 + $0x30] sm:$0xff]
        %v585 = vld [vmem:[%s358 + $0x38] sm:$0xff]
        %587 = vset.pattern.permute.xlu0 0
        %588 = vperm.xlu0 %587, %v578
        %v589 = vpop.permute.xlu0 %588
        %592 = vset.pattern.permute.xlu0 0
        %593 = vperm.xlu0 %592, %v579
        %v594 = vpop.permute.xlu0 %593
        %597 = vset.pattern.permute.xlu0 0
        %598 = vperm.xlu0 %597, %v580
        %v599 = vpop.permute.xlu0 %598
        %602 = vset.pattern.permute.xlu0 0
        %603 = vperm.xlu0 %602, %v581
        %v604 = vpop.permute.xlu0 %603
        %607 = vset.pattern.permute.xlu0 0
        %608 = vperm.xlu0 %607, %v582
        %v609 = vpop.permute.xlu0 %608
        %612 = vset.pattern.permute.xlu0 0
        %613 = vperm.xlu0 %612, %v583
        %v614 = vpop.permute.xlu0 %613
        %617 = vset.pattern.permute.xlu0 0
        %618 = vperm.xlu0 %617, %v584
        %v619 = vpop.permute.xlu0 %618
        %622 = vset.pattern.permute.xlu0 0
        %623 = vperm.xlu0 %622, %v585
        %v624 = vpop.permute.xlu0 %623
        %v626 = vmul.f32 %v500, %v589
        %v627 = vmul.f32 %v505, %v594
        %v628 = vmul.f32 %v510, %v599
        %v629 = vmul.f32 %v515, %v604
        %v630 = vmul.f32 %v520, %v609
        %v631 = vmul.f32 %v525, %v614
        %v632 = vmul.f32 %v530, %v619
        %v633 = vmul.f32 %v535, %v624
        %v634 = vmul.f32 %v540, %v589
        %v635 = vmul.f32 %v545, %v594
        %v636 = vmul.f32 %v550, %v599
        %v637 = vmul.f32 %v555, %v604
        %v638 = vmul.f32 %v560, %v609
        %v639 = vmul.f32 %v565, %v614
        %v640 = vmul.f32 %v570, %v619
        %v641 = vmul.f32 %v575, %v624
        %vm642 = vcmask 523264
        %v643 = vsel %vm642, %v626, 0.0
        %v644 = vsel %vm642, %v627, 0.0
        %v645 = vadd.f32 %v643, %v644
        %v646 = vsel %vm642, %v628, 0.0
        %v647 = vadd.f32 %v645, %v646
        %v648 = vsel %vm642, %v629, 0.0
        %v649 = vadd.f32 %v647, %v648
        %v650 = vsel %vm642, %v630, 0.0
        %v651 = vadd.f32 %v649, %v650
        %v652 = vsel %vm642, %v631, 0.0
        %v653 = vadd.f32 %v651, %v652
        %v654 = vsel %vm642, %v632, 0.0
        %v655 = vadd.f32 %v653, %v654
        %v656 = vsel %vm642, %v633, 0.0
        %v657 = vadd.f32 %v655, %v656
        %v658 = vrot.slane %v657, 4
        %v659 = vadd.f32 %v657, %v658
        %v660 = vrot.slane %v659, 2
        %v661 = vadd.f32 %v659, %v660
        %v662 = vrot.slane %v661, 1
        %v663 = vadd.f32 %v661, %v662
        %v664 = vsel %vm642, %v634, 0.0
        %v665 = vsel %vm642, %v635, 0.0
        %v666 = vadd.f32 %v664, %v665
        %v667 = vsel %vm642, %v636, 0.0
        %v668 = vadd.f32 %v666, %v667
        %v669 = vsel %vm642, %v637, 0.0
        %v670 = vadd.f32 %v668, %v669
        %v671 = vsel %vm642, %v638, 0.0
        %v672 = vadd.f32 %v670, %v671
        %v673 = vsel %vm642, %v639, 0.0
        %v674 = vadd.f32 %v672, %v673
        %v675 = vsel %vm642, %v640, 0.0
        %v676 = vadd.f32 %v674, %v675
        %v677 = vsel %vm642, %v641, 0.0
        %v678 = vadd.f32 %v676, %v677
        %v679 = vrot.slane %v678, 4
        %v680 = vadd.f32 %v678, %v679
        %v681 = vrot.slane %v680, 2
        %v682 = vadd.f32 %v680, %v681
        %v683 = vrot.slane %v682, 1
        %v684 = vadd.f32 %v682, %v683
        %v685 = vmul.f32 %v626, %v500
        %v686 = vmul.f32 %v627, %v505
        %v687 = vmul.f32 %v628, %v510
        %v688 = vmul.f32 %v629, %v515
        %v689 = vmul.f32 %v630, %v520
        %v690 = vmul.f32 %v631, %v525
        %v691 = vmul.f32 %v632, %v530
        %v692 = vmul.f32 %v633, %v535
        %v693 = vmul.f32 %v634, %v540
        %v694 = vmul.f32 %v635, %v545
        %v695 = vmul.f32 %v636, %v550
        %v696 = vmul.f32 %v637, %v555
        %v697 = vmul.f32 %v638, %v560
        %v698 = vmul.f32 %v639, %v565
        %v699 = vmul.f32 %v640, %v570
        %v700 = vmul.f32 %v641, %v575
        %v701 = vsel %vm642, %v685, 0.0
        %v702 = vsel %vm642, %v686, 0.0
        %v703 = vadd.f32 %v701, %v702
        %v704 = vsel %vm642, %v687, 0.0
        %v705 = vadd.f32 %v703, %v704
        %v706 = vsel %vm642, %v688, 0.0
        %v707 = vadd.f32 %v705, %v706
        %v708 = vsel %vm642, %v689, 0.0
        %v709 = vadd.f32 %v707, %v708
        %v710 = vsel %vm642, %v690, 0.0
        %v711 = vadd.f32 %v709, %v710
        %v712 = vsel %vm642, %v691, 0.0
        %v713 = vadd.f32 %v711, %v712
        %v714 = vsel %vm642, %v692, 0.0
        %v715 = vadd.f32 %v713, %v714
        %v716 = vrot.slane %v715, 4
        %v717 = vadd.f32 %v715, %v716
        %v718 = vrot.slane %v717, 2
        %v719 = vadd.f32 %v717, %v718
        %v720 = vrot.slane %v719, 1
        %v721 = vadd.f32 %v719, %v720
        %v722 = vsel %vm642, %v693, 0.0
        %v723 = vsel %vm642, %v694, 0.0
        %v724 = vadd.f32 %v722, %v723
        %v725 = vsel %vm642, %v695, 0.0
        %v726 = vadd.f32 %v724, %v725
        %v727 = vsel %vm642, %v696, 0.0
        %v728 = vadd.f32 %v726, %v727
        %v729 = vsel %vm642, %v697, 0.0
        %v730 = vadd.f32 %v728, %v729
        %v731 = vsel %vm642, %v698, 0.0
        %v732 = vadd.f32 %v730, %v731
        %v733 = vsel %vm642, %v699, 0.0
        %v734 = vadd.f32 %v732, %v733
        %v735 = vsel %vm642, %v700, 0.0
        %v736 = vadd.f32 %v734, %v735
        %v737 = vrot.slane %v736, 4
        %v738 = vadd.f32 %v736, %v737
        %v739 = vrot.slane %v738, 2
        %v740 = vadd.f32 %v738, %v739
        %v741 = vrot.slane %v740, 1
        %v742 = vadd.f32 %v740, %v741
        %v743 = vld [vmem:[%s5] sm:$0xff]
        %v744 = vld [vmem:[%s5 + $0x8] sm:$0xff]
        %v745 = vld [vmem:[%s5 + $0x10] sm:$0xff]
        %v746 = vld [vmem:[%s5 + $0x18] sm:$0xff]
        %v747 = vld [vmem:[%s5 + $0x20] sm:$0xff]
        %v748 = vld [vmem:[%s5 + $0x28] sm:$0xff]
        %v749 = vld [vmem:[%s5 + $0x30] sm:$0xff]
        %v750 = vld [vmem:[%s5 + $0x38] sm:$0xff]
        %vm753 = vcmask 1041409
        %v754 = vsel %vm753, %v684, %v663
        %v755 = vsel %vm642, %v754, 0
        %757 = vmatprep.subr.mxu0 0.0
        %758 = vmatpush1.msra.mxu0 %v743
        %759 = vmatprep.subr.mxu0 0.0
        %760 = vmatpush1.msra.mxu0 %v744
        %761 = vmatprep.subr.mxu0 0.0
        %762 = vmatpush1.msra.mxu0 %v745
        %763 = vmatprep.subr.mxu0 0.0
        %764 = vmatpush1.msra.mxu0 %v746
        %765 = vmatprep.subr.mxu0 0.0
        %766 = vmatpush1.msra.mxu0 %v747
        %767 = vmatprep.subr.mxu0 0.0
        %768 = vmatpush1.msra.mxu0 %v748
        %769 = vmatprep.subr.mxu0 0.0
        %770 = vmatpush1.msra.mxu0 %v749
        %771 = vmatprep.subr.mxu0 0.0
        %772 = vmatpush1.msra.mxu0 %v750
        %773 = vmatprep.subr.mxu0 0.0
        %774 = vmatpush1.msra.mxu0 0.0
        %775 = vmatprep.subr.mxu0 0.0
        %776 = vmatpush1.msra.mxu0 0.0
        %777 = vmatprep.subr.mxu0 0.0
        %778 = vmatpush1.msra.mxu0 0.0
        %779 = vmatprep.subr.mxu0 0.0
        %780 = vmatpush1.msra.mxu0 0.0
        %781 = vmatprep.subr.mxu0 0.0
        %782 = vmatpush1.msra.mxu0 0.0
        %783 = vmatprep.subr.mxu0 0.0
        %784 = vmatpush1.msra.mxu0 0.0
        %785 = vmatprep.subr.mxu0 0.0
        %786 = vmatpush1.msra.mxu0 0.0
        %787 = vmatprep.subr.mxu0 0.0
        %788 = vmatpush1.msra.mxu0 0.0
        %789 = vmatprep.subr.mxu0 0.0
        %790 = vmatpush1.msra.mxu0 0.0
        %791 = vmatprep.subr.mxu0 0.0
        %792 = vmatpush1.msra.mxu0 0.0
        %793 = vmatprep.subr.mxu0 0.0
        %794 = vmatpush1.msra.mxu0 0.0
        %795 = vmatprep.subr.mxu0 0.0
        %796 = vmatpush1.msra.mxu0 0.0
        %797 = vmatprep.subr.mxu0 0.0
        %798 = vmatpush1.msra.mxu0 0.0
        %799 = vmatprep.subr.mxu0 0.0
        %800 = vmatpush1.msra.mxu0 0.0
        %801 = vmatprep.subr.mxu0 0.0
        %802 = vmatpush1.msra.mxu0 0.0
        %803 = vmatprep.subr.mxu0 0.0
        %804 = vmatpush1.msra.mxu0 0.0
        %805 = vmatprep.subr.mxu0 0.0
        %806 = vmatpush1.msra.mxu0 0.0
        %807 = vmatprep.subr.mxu0 0.0
        %808 = vmatpush1.msra.mxu0 0.0
        %809 = vmatprep.subr.mxu0 0.0
        %810 = vmatpush1.msra.mxu0 0.0
        %811 = vmatprep.subr.mxu0 0.0
        %812 = vmatpush1.msra.mxu0 0.0
        %813 = vmatprep.subr.mxu0 0.0
        %814 = vmatpush1.msra.mxu0 0.0
        %815 = vmatprep.subr.mxu0 0.0
        %816 = vmatpush1.msra.mxu0 0.0
        %817 = vmatprep.subr.mxu0 0.0
        %818 = vmatpush1.msra.mxu0 0.0
        %819 = vmatprep.subr.mxu0 0.0
        %820 = vmatpush1.msra.mxu0 0.0
        %821 = vmatprep.mubr.f32.mxu0 0.0
        %822 = vmatmul.mubr.f32.gmra.mrb[0].mxu0 %v755
        %v823 = vpop.f32.mrb[0].mxu0
        %v824 = vadd.f32 0.0, %v823
        %v825 = vpop.f32.mrb[0].mxu0
        %826 = vdwg.mxu0
        %v829 = vsel %vm753, %v742, %v721
        %v830 = vsel %vm642, %v829, 0
        %832 = vmatprep.subr.mxu0 0.0
        %833 = vmatpush1.msra.mxu0 %v743
        %834 = vmatprep.subr.mxu0 0.0
        %835 = vmatpush1.msra.mxu0 %v744
        %836 = vmatprep.subr.mxu0 0.0
        %837 = vmatpush1.msra.mxu0 %v745
        %838 = vmatprep.subr.mxu0 0.0
        %839 = vmatpush1.msra.mxu0 %v746
        %840 = vmatprep.subr.mxu0 0.0
        %841 = vmatpush1.msra.mxu0 %v747
        %842 = vmatprep.subr.mxu0 0.0
        %843 = vmatpush1.msra.mxu0 %v748
        %844 = vmatprep.subr.mxu0 0.0
        %845 = vmatpush1.msra.mxu0 %v749
        %846 = vmatprep.subr.mxu0 0.0
        %847 = vmatpush1.msra.mxu0 %v750
        %848 = vmatprep.subr.mxu0 0.0
        %849 = vmatpush1.msra.mxu0 0.0
        %850 = vmatprep.subr.mxu0 0.0
        %851 = vmatpush1.msra.mxu0 0.0
        %852 = vmatprep.subr.mxu0 0.0
        %853 = vmatpush1.msra.mxu0 0.0
        %854 = vmatprep.subr.mxu0 0.0
        %855 = vmatpush1.msra.mxu0 0.0
        %856 = vmatprep.subr.mxu0 0.0
        %857 = vmatpush1.msra.mxu0 0.0
        %858 = vmatprep.subr.mxu0 0.0
        %859 = vmatpush1.msra.mxu0 0.0
        %860 = vmatprep.subr.mxu0 0.0
        %861 = vmatpush1.msra.mxu0 0.0
        %862 = vmatprep.subr.mxu0 0.0
        %863 = vmatpush1.msra.mxu0 0.0
        %864 = vmatprep.subr.mxu0 0.0
        %865 = vmatpush1.msra.mxu0 0.0
        %866 = vmatprep.subr.mxu0 0.0
        %867 = vmatpush1.msra.mxu0 0.0
        %868 = vmatprep.subr.mxu0 0.0
        %869 = vmatpush1.msra.mxu0 0.0
        %870 = vmatprep.subr.mxu0 0.0
        %871 = vmatpush1.msra.mxu0 0.0
        %872 = vmatprep.subr.mxu0 0.0
        %873 = vmatpush1.msra.mxu0 0.0
        %874 = vmatprep.subr.mxu0 0.0
        %875 = vmatpush1.msra.mxu0 0.0
        %876 = vmatprep.subr.mxu0 0.0
        %877 = vmatpush1.msra.mxu0 0.0
        %878 = vmatprep.subr.mxu0 0.0
        %879 = vmatpush1.msra.mxu0 0.0
        %880 = vmatprep.subr.mxu0 0.0
        %881 = vmatpush1.msra.mxu0 0.0
        %882 = vmatprep.subr.mxu0 0.0
        %883 = vmatpush1.msra.mxu0 0.0
        %884 = vmatprep.subr.mxu0 0.0
        %885 = vmatpush1.msra.mxu0 0.0
        %886 = vmatprep.subr.mxu0 0.0
        %887 = vmatpush1.msra.mxu0 0.0
        %888 = vmatprep.subr.mxu0 0.0
        %889 = vmatpush1.msra.mxu0 0.0
        %890 = vmatprep.subr.mxu0 0.0
        %891 = vmatpush1.msra.mxu0 0.0
        %892 = vmatprep.subr.mxu0 0.0
        %893 = vmatpush1.msra.mxu0 0.0
        %894 = vmatprep.subr.mxu0 0.0
        %895 = vmatpush1.msra.mxu0 0.0
        %896 = vmatprep.mubr.f32.mxu0 0.0
        %897 = vmatmul.mubr.f32.gmra.mrb[0].mxu0 %v830
        %v898 = vpop.f32.mrb[0].mxu0
        %v899 = vadd.f32 0.0, %v898
        %v900 = vpop.f32.mrb[0].mxu0
        %901 = vdwg.mxu0
        %v902 = vmul.f32 %v824, %v824
        %v903 = vsub.f32 %v899, %v902
        %v904 = vadd.f32 %v903, 1e-05
        %v905 = vrsqrt.pop %v904
        %v906 = vld [vmem:[%s350] sm:$0x1]
        %v908 = vlaneseq
        %v909 = vshrl.u32 %v908, 7
        %v910 = vsub.s32 0, %v909
        %v911 = vrot.slane %v906, %v910
        %v913 = vmul.f32 %v905, %v911
        %v914 = vld [vmem:[%s353] sm:$0x1]
        %v915 = vmul.f32 %v824, %v913
        %v917 = vlaneseq
        %v918 = vshrl.u32 %v917, 7
        %v919 = vsub.s32 0, %v918
        %v920 = vrot.slane %v914, %v919
        %v922 = vsub.f32 %v920, %v915
        %v925 = vunpack.c.l.s4 1966171168
        %v926 = vunpack.c.0.s8 %v925
        %v927 = vlaneseq
        %v928 = vshrl.u32 %v927, 7
        %v929 = vsub.s32 %v926, %v928
        %v930 = vrot.slane %v913, %v929
        %v931 = vcombine.high %v930, %v930
        %v933 = vunpack.c.l.s4 1966171168
        %v934 = vunpack.c.0.s8 %v933
        %v935 = vlaneseq
        %v936 = vshrl.u32 %v935, 7
        %v937 = vsub.s32 %v934, %v936
        %v938 = vrot.slane %v930, %v937
        %v940 = vunpack.c.l.s4 1966171168
        %v941 = vunpack.c.0.s8 %v940
        %v942 = vlaneseq
        %v943 = vshrl.u32 %v942, 7
        %v944 = vsub.s32 %v941, %v943
        %v945 = vrot.slane %v931, %v944
        %v946 = vlaneseq
        %v947 = vshrl.u32 %v946, 7
        %v948 = vsub.s32 0, %v947
        %v949 = vrot.slane %v938, %v948
        %v950 = vlaneseq
        %v951 = vshrl.u32 %v950, 7
        %v952 = vsub.s32 0, %v951
        %v953 = vrot.slane %v945, %v952
        %v956 = vmul.f32 %v500, %v949
        %v957 = vmul.f32 %v505, %v949
        %v958 = vmul.f32 %v510, %v949
        %v959 = vmul.f32 %v515, %v949
        %v960 = vmul.f32 %v520, %v949
        %v961 = vmul.f32 %v525, %v949
        %v962 = vmul.f32 %v530, %v949
        %v963 = vmul.f32 %v535, %v949
        %v964 = vmul.f32 %v540, %v953
        %v965 = vmul.f32 %v545, %v953
        %v966 = vmul.f32 %v550, %v953
        %v967 = vmul.f32 %v555, %v953
        %v968 = vmul.f32 %v560, %v953
        %v969 = vmul.f32 %v565, %v953
        %v970 = vmul.f32 %v570, %v953
        %v971 = vmul.f32 %v575, %v953
        %v974 = vunpack.c.l.s4 1966171168
        %v975 = vunpack.c.0.s8 %v974
        %v976 = vlaneseq
        %v977 = vshrl.u32 %v976, 7
        %v978 = vsub.s32 %v975, %v977
        %v979 = vrot.slane %v922, %v978
        %v980 = vcombine.high %v979, %v979
        %v982 = vunpack.c.l.s4 1966171168
        %v983 = vunpack.c.0.s8 %v982
        %v984 = vlaneseq
        %v985 = vshrl.u32 %v984, 7
        %v986 = vsub.s32 %v983, %v985
        %v987 = vrot.slane %v979, %v986
        %v989 = vunpack.c.l.s4 1966171168
        %v990 = vunpack.c.0.s8 %v989
        %v991 = vlaneseq
        %v992 = vshrl.u32 %v991, 7
        %v993 = vsub.s32 %v990, %v992
        %v994 = vrot.slane %v980, %v993
        %v995 = vlaneseq
        %v996 = vshrl.u32 %v995, 7
        %v997 = vsub.s32 0, %v996
        %v998 = vrot.slane %v987, %v997
        %v999 = vlaneseq
        %v1000 = vshrl.u32 %v999, 7
        %v1001 = vsub.s32 0, %v1000
        %v1002 = vrot.slane %v994, %v1001
        %v1005 = vadd.f32 %v956, %v998
        %v1006 = vadd.f32 %v957, %v998
        %v1007 = vadd.f32 %v958, %v998
        %v1008 = vadd.f32 %v959, %v998
        %v1009 = vadd.f32 %v960, %v998
        %v1010 = vadd.f32 %v961, %v998
        %v1011 = vadd.f32 %v962, %v998
        %v1012 = vadd.f32 %v963, %v998
        %v1013 = vadd.f32 %v964, %v1002
        %v1014 = vadd.f32 %v965, %v1002
        %v1015 = vadd.f32 %v966, %v1002
        %v1016 = vadd.f32 %v967, %v1002
        %v1017 = vadd.f32 %v968, %v1002
        %v1018 = vadd.f32 %v969, %v1002
        %v1019 = vadd.f32 %v970, %v1002
        %v1020 = vadd.f32 %v971, %v1002
        %1021 = vst.msk [vmem:[%s334] sm:$0xff] %vm642, %v1005
        %1022 = vst.msk [vmem:[%s334 + $0x8] sm:$0xff] %vm642, %v1006
        %1023 = vst.msk [vmem:[%s334 + $0x10] sm:$0xff] %vm642, %v1007
        %1024 = vst.msk [vmem:[%s334 + $0x18] sm:$0xff] %vm642, %v1008
        %1025 = vst.msk [vmem:[%s334 + $0x20] sm:$0xff] %vm642, %v1009
        %1026 = vst.msk [vmem:[%s334 + $0x28] sm:$0xff] %vm642, %v1010
        %1027 = vst.msk [vmem:[%s334 + $0x30] sm:$0xff] %vm642, %v1011
        %1028 = vst.msk [vmem:[%s334 + $0x38] sm:$0xff] %vm642, %v1012
        %1029 = vst.msk [vmem:[%s334 + $0x40] sm:$0xff] %vm642, %v1013
        %1030 = vst.msk [vmem:[%s334 + $0x48] sm:$0xff] %vm642, %v1014
        %1031 = vst.msk [vmem:[%s334 + $0x50] sm:$0xff] %vm642, %v1015
        %1032 = vst.msk [vmem:[%s334 + $0x58] sm:$0xff] %vm642, %v1016
        %1033 = vst.msk [vmem:[%s334 + $0x60] sm:$0xff] %vm642, %v1017
        %1034 = vst.msk [vmem:[%s334 + $0x68] sm:$0xff] %vm642, %v1018
        %1035 = vst.msk [vmem:[%s334 + $0x70] sm:$0xff] %vm642, %v1019
        %1036 = vst.msk [vmem:[%s334 + $0x78] sm:$0xff] %vm642, %v1020
        %s1037 = sand.u32 %s206, 1
        %s1038 = scalar_lea.sflag [#allocation3], %s1037
        %s1039 = sand.u32 %s206, 1
        %s1040 = smul.addr %s1039, 128
        %s1041 = scalar_lea.vmem [#allocation2], %s1040
        // Predicated region
        $region49: #{tpu_custom_call.1} parent=47 // pred_check
          %p1042 = pneg %p216
        $region50: #{tpu_custom_call.1} parent=47 // pred_check_branch
          %1044 = sbr.rel (%p1042) target = $region52
        $region51: #{tpu_custom_call.1} parent=47 // pred_region
          %s1046 = ssub.s32 2048, 2048
          %1047 = vsyncadd %s1038, %s1046
          %s1048 = smul.addr %s21, 16
          %s1049 = smul.addr %s1048, 128
          %s1050 = scalar_lea.hbm %s7, %s1049
          %s1051 = sshll.u32 %s1041, 4
          %s1052 = int_to_ptr.vmem [resolvable:$true] %s1051
          %1057 = dma.vmem_to_hbm [thread:$0]  %s1052, 2048, %s1050, %s1038, 128, 128, 8
        $region52: #{tpu_custom_call.1} parent=47 // pred_fallthru
          _
      $region48: #{tpu_custom_call.1} parent=5 // pred_fallthru
        _
      %p1058 = scmp.le.s32.totalorder 2, %s16
      // Predicated region
      $region53: #{tpu_custom_call.1} parent=5 // pred_check
        %p1059 = pneg %p1058
      $region54: #{tpu_custom_call.1} parent=5 // pred_check_branch
        %1061 = sbr.rel (%p1059) target = $region56
      $region55: #{tpu_custom_call.1} parent=5 // pred_region
        %s1062 = ssub.s32 %s16, 2
        // Predicated region
        $region57: #{tpu_custom_call.1} parent=55 // pred_check
          %p1063 = pneg %p222
        $region58: #{tpu_custom_call.1} parent=55 // pred_check_branch
          %1065 = sbr.rel (%p1063) target = $region60
        $region59: #{tpu_custom_call.1} parent=55 // pred_region
          %s1066 = sand.u32 %s207, 1
          %s1067 = scalar_lea.sflag [#allocation3], %s1066
          %s1068 = sand.u32 %s207, 1
          %s1069 = smul.addr %s1068, 128
          %s1070 = scalar_lea.vmem [#allocation2], %s1069
          %1071 = dma.done %s1067, 2048
        $region60: #{tpu_custom_call.1} parent=55 // pred_fallthru
          _
      $region56: #{tpu_custom_call.1} parent=5 // pred_fallthru
        _
    $region6: #{tpu_custom_call.1} parent=1 // loop_footer
      %s20 = sadd.s32 1, %s16
    $region7: #{tpu_custom_call.1} parent=1 // loop_footer_branch
      %15 = sbr.rel target = $region3
    $region8: #{tpu_custom_call.1} parent=1 // loop_exit
      _
    %1072 = vsyncpa [#allocation3], 1
    %s1073 = scalar_lea.sflag [#allocation3], 1
    %1074 = vsyncpa %s1073, 1

</llo_original>
